<compile_context>
chip_gen: v7x
topology: tpu7x:2x2x1
jax: 0.10.0
libtpu: 0.0.40
codegen_flags: <defaults>
</compile_context>

<pallas_src>
import functools

import jax
import jax.numpy as jnp
from jax.experimental import pallas as pl
from jax.experimental.pallas import tpu as pltpu


def _round_up(n, m):
    return ((n + m - 1) // m) * m


def _dark_channel_kernel(x_ref, o_ref, pad_ref, *, C, H, W, p, RS, CS):
    # x_ref: (1, C, H, W) block, o_ref: (1, 1, H, W) block,
    # pad_ref: (HP, WP) f32 VMEM scratch with HP % 8 == 0, WP % 128 == 0.
    HP, WP = pad_ref.shape

    # ---- minimum over channels (the "dark channel" across C) ----
    cm = x_ref[0, 0].astype(jnp.float32)
    for c in range(1, C):
        cm = jnp.minimum(cm, x_ref[0, c].astype(jnp.float32))

    # ---- place channel-min into a +inf padded scratch (halo >= p on all sides) ----
    pad_ref[...] = jnp.full((HP, WP), jnp.inf, dtype=jnp.float32)
    pad_ref[pl.ds(RS, H), pl.ds(CS, W)] = cm
    padv = pad_ref[...]

    # ---- separable (2p+1)x(2p+1) min-pool via lane / sublane rotations ----
    # Wrap-around from roll only ever lands in the +inf halo (halo >= p), and
    # out-of-image neighbors read +inf, matching MaxPool2d's -inf padding on -x.
    wmin = padv
    for k in range(1, p + 1):
        wmin = jnp.minimum(wmin, pltpu.roll(padv, k, axis=1))
        wmin = jnp.minimum(wmin, pltpu.roll(padv, WP - k, axis=1))
    hmin = wmin
    for k in range(1, p + 1):
        hmin = jnp.minimum(hmin, pltpu.roll(wmin, k, axis=0))
        hmin = jnp.minimum(hmin, pltpu.roll(wmin, HP - k, axis=0))

    o_ref[0, 0] = hmin[RS:RS + H, CS:CS + W].astype(o_ref.dtype)


def dark_channel(x, window_size):
    """x: (B, C, H, W). Returns (B, 1, H, W), same dtype as x."""
    if window_size % 2 == 0:
        # TODO(synk): even window sizes change the output spatial size in the
        # PyTorch module; only odd windows (same-size output) are implemented.
        raise NotImplementedError("dark_channel: only odd window_size supported")
    B, C, H, W = x.shape
    p = (window_size - 1) // 2

    # Aligned halo offsets: top/left halo is >= p and a multiple of (8, 128) so
    # the scratch sub-window store starts on a native tile boundary.
    RS = _round_up(p, 8) if p > 0 else 0
    CS = _round_up(p, 128) if p > 0 else 0
    HP = _round_up(RS + H + p, 8)
    WP = _round_up(CS + W + p, 128)

    kernel = functools.partial(
        _dark_channel_kernel, C=C, H=H, W=W, p=p, RS=RS, CS=CS)

    return pl.pallas_call(
        kernel,
        out_shape=jax.ShapeDtypeStruct((B, 1, H, W), x.dtype),
        grid=(B,),
        in_specs=[pl.BlockSpec((1, C, H, W), lambda b: (b, 0, 0, 0))],
        out_specs=pl.BlockSpec((1, 1, H, W), lambda b: (b, 0, 0, 0)),
        scratch_shapes=[pltpu.VMEM((HP, WP), jnp.float32)],
        compiler_params=pltpu.CompilerParams(
            dimension_semantics=("parallel",)),
    )(x)


def _reference(x, window_size):
    """Pure-JAX reference matching the PyTorch module."""
    p = (window_size - 1) // 2
    B, C, H, W = x.shape
    cm = jnp.min(x.astype(jnp.float32), axis=1)                       # (B, H, W)
    cmp_ = jnp.pad(cm, ((0, 0), (p, p), (p, p)), constant_values=jnp.inf)
    out = jnp.full((B, H, W), jnp.inf, dtype=jnp.float32)
    for di in range(window_size):
        for dj in range(window_size):
            out = jnp.minimum(out, cmp_[:, di:di + H, dj:dj + W])
    return out[:, None, :, :].astype(x.dtype)


if __name__ == "__main__":
    key = jax.random.PRNGKey(0)
    # NCHW input, like an image / feature map
    x = jax.random.normal(key, (2, 4, 16, 16), dtype=jnp.float32) * 2.0
    window_size = 3

    y = dark_channel(x, window_size)
    y = jax.block_until_ready(y)

    y_ref = _reference(x, window_size)
    assert y.shape == (2, 1, 16, 16) and y.dtype == x.dtype
    assert jnp.max(jnp.abs(y - y_ref)) < 1e-6

    print("KERNEL_OK")
</pallas_src>

<mosaic_0001>
module attributes {stable_mosaic.version = 11 : i64} {
  func.func @_dark_channel_kernel(%arg0: i32, %arg1: memref<1x4x16x16xf32, #tpu.memory_space<vmem>>, %arg2: memref<1x1x16x16xf32, #tpu.memory_space<vmem>>, %arg3: memref<32x256xf32, #tpu.memory_space<vmem>>) attributes {dimension_semantics = [#tpu.dimension_semantics<parallel>], iteration_bounds = array<i64: 2>, scalar_prefetch = 0 : i64, scratch_operands = 1 : i64, tpu.core_type = #tpu.core_type<tc>, window_params = [{transform_indices = @transform_0, window_bounds = array<i64: 1, 4, 16, 16>}, {transform_indices = @transform_1, window_bounds = array<i64: 1, 1, 16, 16>}]} {
    %c0 = arith.constant 0 : index
    %c0_0 = arith.constant 0 : index
    %c0_1 = arith.constant 0 : index
    %c0_2 = arith.constant 0 : index
    %0 = vector.load %arg1[%c0, %c0_0, %c0_1, %c0_2] : memref<1x4x16x16xf32, #tpu.memory_space<vmem>>, vector<1x1x16x16xf32>
    %1 = vector.shape_cast %0 : vector<1x1x16x16xf32> to vector<16x16xf32>
    %c0_3 = arith.constant 0 : index
    %c1 = arith.constant 1 : index
    %c0_4 = arith.constant 0 : index
    %c0_5 = arith.constant 0 : index
    %2 = vector.load %arg1[%c0_3, %c1, %c0_4, %c0_5] : memref<1x4x16x16xf32, #tpu.memory_space<vmem>>, vector<1x1x16x16xf32>
    %3 = vector.shape_cast %2 : vector<1x1x16x16xf32> to vector<16x16xf32>
    %4 = arith.minimumf %1, %3 : vector<16x16xf32>
    %c0_6 = arith.constant 0 : index
    %c2 = arith.constant 2 : index
    %c0_7 = arith.constant 0 : index
    %c0_8 = arith.constant 0 : index
    %5 = vector.load %arg1[%c0_6, %c2, %c0_7, %c0_8] : memref<1x4x16x16xf32, #tpu.memory_space<vmem>>, vector<1x1x16x16xf32>
    %6 = vector.shape_cast %5 : vector<1x1x16x16xf32> to vector<16x16xf32>
    %7 = arith.minimumf %4, %6 : vector<16x16xf32>
    %c0_9 = arith.constant 0 : index
    %c3 = arith.constant 3 : index
    %c0_10 = arith.constant 0 : index
    %c0_11 = arith.constant 0 : index
    %8 = vector.load %arg1[%c0_9, %c3, %c0_10, %c0_11] : memref<1x4x16x16xf32, #tpu.memory_space<vmem>>, vector<1x1x16x16xf32>
    %9 = vector.shape_cast %8 : vector<1x1x16x16xf32> to vector<16x16xf32>
    %10 = arith.minimumf %7, %9 : vector<16x16xf32>
    %cst = arith.constant 0x7F800000 : f32
    %11 = vector.broadcast %cst : f32 to vector<32x256xf32>
    %c0_12 = arith.constant 0 : index
    %c0_13 = arith.constant 0 : index
    %12 = vector.load %arg3[%c0_12, %c0_13] : memref<32x256xf32, #tpu.memory_space<vmem>>, vector<32x256xf32>
    tpu.vector_store %arg3[%c0_12, %c0_13], %11 {strides = array<i32>} : memref<32x256xf32, #tpu.memory_space<vmem>>, vector<32x256xf32>,
    %c8 = arith.constant 8 : index
    %c128 = arith.constant 128 : index
    %13 = vector.load %arg3[%c8, %c128] : memref<32x256xf32, #tpu.memory_space<vmem>>, vector<16x16xf32>
    tpu.vector_store %arg3[%c8, %c128], %10 {strides = array<i32>} : memref<32x256xf32, #tpu.memory_space<vmem>>, vector<16x16xf32>,
    %c0_14 = arith.constant 0 : index
    %c0_15 = arith.constant 0 : index
    %14 = vector.load %arg3[%c0_14, %c0_15] : memref<32x256xf32, #tpu.memory_space<vmem>>, vector<32x256xf32>
    %c1_i32 = arith.constant 1 : i32
    %15 = tpu.dynamic_rotate %14 by %c1_i32 dim 1 : vector<32x256xf32>, i32 -> vector<32x256xf32>
    %16 = arith.minimumf %14, %15 : vector<32x256xf32>
    %c255_i32 = arith.constant 255 : i32
    %17 = tpu.dynamic_rotate %14 by %c255_i32 dim 1 : vector<32x256xf32>, i32 -> vector<32x256xf32>
    %18 = arith.minimumf %16, %17 : vector<32x256xf32>
    %c1_i32_16 = arith.constant 1 : i32
    %19 = tpu.dynamic_rotate %18 by %c1_i32_16 dim 0 : vector<32x256xf32>, i32 -> vector<32x256xf32>
    %20 = arith.minimumf %18, %19 : vector<32x256xf32>
    %c31_i32 = arith.constant 31 : i32
    %21 = tpu.dynamic_rotate %18 by %c31_i32 dim 0 : vector<32x256xf32>, i32 -> vector<32x256xf32>
    %22 = arith.minimumf %20, %21 : vector<32x256xf32>
    %23 = vector.extract_strided_slice %22 {offsets = [8, 128], sizes = [16, 16], strides = [1, 1]} : vector<32x256xf32> to vector<16x16xf32>
    %c0_17 = arith.constant 0 : index
    %c0_18 = arith.constant 0 : index
    %c0_19 = arith.constant 0 : index
    %c0_20 = arith.constant 0 : index
    %24 = vector.load %arg2[%c0_17, %c0_18, %c0_19, %c0_20] : memref<1x1x16x16xf32, #tpu.memory_space<vmem>>, vector<1x1x16x16xf32>
    %25 = vector.shape_cast %24 : vector<1x1x16x16xf32> to vector<16x16xf32>
    %26 = vector.shape_cast %23 : vector<16x16xf32> to vector<1x1x16x16xf32>
    tpu.vector_store %arg2[%c0_17, %c0_18, %c0_19, %c0_20], %26 {strides = array<i32>} : memref<1x1x16x16xf32, #tpu.memory_space<vmem>>, vector<1x1x16x16xf32>,
    return
  }
  func.func @transform_0(%arg0: i32) -> (i32, i32, i32, i32) {
    %c0_i32 = arith.constant 0 : i32
    %c0_i32_0 = arith.constant 0 : i32
    %c0_i32_1 = arith.constant 0 : i32
    %c0_i32_2 = arith.constant 0 : i32
    return %arg0, %c0_i32, %c0_i32_0, %c0_i32_1 : i32, i32, i32, i32
  }
  func.func @transform_1(%arg0: i32) -> (i32, i32, i32, i32) {
    %c0_i32 = arith.constant 0 : i32
    %c0_i32_0 = arith.constant 0 : i32
    %c0_i32_1 = arith.constant 0 : i32
    %c0_i32_2 = arith.constant 0 : i32
    return %arg0, %c0_i32, %c0_i32_0, %c0_i32_1 : i32, i32, i32, i32
  }
}

</mosaic_0001>

<llo_original>
// kernel: tpu_custom_call.1
$region0: #{tpu_custom_call.1}
  #allocation0 [shape = 'u32[]', space=smem, size = 0x4, offset = 0x4, fixed_abs, tag = 'smem constant byte address 0x4 - core index']
  #allocation1 [shape = 'u32[144,128]{1,0:T(1,128)}', space=vmem, size = 0x12000, scoped, tag = 'internal scratch']
  #allocation2 [shape = 'f32[32,256]{1,0:T(8,128)}', space=vmem, size = 0x8000, scoped, tag = 'scratch operand']
  %s0 = inlined_call_operand.hbm [shape: f32[2,4,16,16], index: 0, kind: input, shape index: {}]
  %s1 = inlined_call_operand.hbm [shape: f32[2,1,16,16], index: 1, kind: output, shape index: {}]
  %s2 = sld [smem:[#allocation0]]
  $region41: #{tpu_custom_call.1} parent=0
    _
  %s4 = ssub.s32 1, %s2
  %s5 = scalar_select 0, %s4, %s2
  $region1: #{tpu_custom_call.1} parent=0
    #allocation3 [shape = 'u8[65536]{0}', space=vmem, size = 0x10000, scoped, tag = 'input window, operand 0']
    #allocation4 [shape = 's32[2]{0}', space=sflag, size = 0x8, scoped, tag = 'scoped memory for tpu_custom_call.1']
    #allocation5 [shape = 's32[2]{0}', space=sflag, size = 0x8, scoped, tag = 'scoped memory for tpu_custom_call.1']
    #allocation6 [shape = 'u8[16384]{0}', space=vmem, size = 0x4000, scoped, tag = 'output window, operand 0']
    %6 = vsyncpa [#allocation4], 0
    %s7 = scalar_lea.sflag [#allocation4], 1
    %8 = vsyncpa %s7, 0
    %9 = vsyncpa [#allocation5], 0
    %s10 = scalar_lea.sflag [#allocation5], 1
    %11 = vsyncpa %s10, 0
    loop: start=0, step=1, limit=4
    $region2: #{tpu_custom_call.1} parent=1 // loop_pre_header
      _
    $region3: #{tpu_custom_call.1} parent=1 // loop_header
      %s13 = sphi 0, %s17
      %p14 = scmp.ge.s32.totalorder %s13, 4
      %s23 = sphi 0, %s25
      %s26 = sphi 0, %s23
      %s27 = sphi 0, %s26
      %s43 = sphi 0, %s27
      %s49 = sphi 0, %s51
      %s52 = sphi 0, %s49
      %s53 = sphi 0, %s52
      %s69 = sphi 0, %s53
    $region4: #{tpu_custom_call.1} parent=1 // loop_header_branch
      %16 = sbr.rel (%p14) target = $region8
    $region5: #{tpu_custom_call.1} parent=1 // loop_body
      %s18 = ssub.s32 %s13, 1
      %s19 = ssub.s32 %s13, 2
      %s20 = sadd.s32 %s13, 1
      %s21 = ssub.s32 %s13, %s20
      %p22 = scmp.eq.s32.totalorder %s21, 0
      %s24 = sadd.s32 %s23, 1
      %s25 = scalar_select %p22, %s23, %s24
      %p28 = pneg %p22
      %p29 = scmp.eq.s32.totalorder %s13, 1
      %p30 = por %p28, %p29
      %p31 = scmp.ne.s32.totalorder %s23, %s26
      %p32 = scmp.eq.s32.totalorder %s13, 0
      %p33 = por %p31, %p32
      %p34 = scmp.ne.s32.totalorder %s23, %s26
      %p35 = scmp.eq.s32.totalorder %s18, 1
      %p36 = por %p34, %p35
      %p37 = scmp.ne.s32.totalorder %s26, %s27
      %p38 = scmp.eq.s32.totalorder %s18, 0
      %p39 = por %p37, %p38
      %p40 = scmp.ne.s32.totalorder %s26, %s27
      %p41 = scmp.eq.s32.totalorder %s19, 1
      %p42 = por %p40, %p41
      %p44 = scmp.ne.s32.totalorder %s27, %s43
      %p45 = scmp.eq.s32.totalorder %s19, 0
      %p46 = por %p44, %p45
      %s47 = ssub.s32 %s13, %s20
      %p48 = scmp.eq.s32.totalorder %s47, 0
      %s50 = sadd.s32 %s49, 1
      %s51 = scalar_select %p48, %s49, %s50
      %p54 = pneg %p48
      %p55 = scmp.eq.s32.totalorder %s13, 1
      %p56 = por %p54, %p55
      %p57 = scmp.ne.s32.totalorder %s49, %s52
      %p58 = scmp.eq.s32.totalorder %s13, 0
      %p59 = por %p57, %p58
      %p60 = scmp.ne.s32.totalorder %s49, %s52
      %p61 = scmp.eq.s32.totalorder %s18, 1
      %p62 = por %p60, %p61
      %p63 = scmp.ne.s32.totalorder %s52, %s53
      %p64 = scmp.eq.s32.totalorder %s18, 0
      %p65 = por %p63, %p64
      %p66 = scmp.ne.s32.totalorder %s52, %s53
      %p67 = scmp.eq.s32.totalorder %s19, 1
      %p68 = por %p66, %p67
      %p70 = scmp.ne.s32.totalorder %s53, %s69
      %p71 = scmp.eq.s32.totalorder %s19, 0
      %p72 = por %p70, %p71
      %p73 = scmp.le.s32.totalorder 1, %s13
      %p74 = scmp.lt.s32.totalorder %s13, 3
      %p75 = pnand %p73, %p74
      %p76 = pneg %p75
      // Predicated region
      $region9: #{tpu_custom_call.1} parent=5 // pred_check
        _
      $region10: #{tpu_custom_call.1} parent=5 // pred_check_branch
        %78 = sbr.rel (%p75) target = $region12
      $region11: #{tpu_custom_call.1} parent=5 // pred_region
        %s79 = ssub.s32 %s13, 1
      $region12: #{tpu_custom_call.1} parent=5 // pred_fallthru
        _
      %p80 = scmp.lt.s32.totalorder %s13, 2
      // Predicated region
      $region13: #{tpu_custom_call.1} parent=5 // pred_check
        %p81 = pneg %p80
      $region14: #{tpu_custom_call.1} parent=5 // pred_check_branch
        %83 = sbr.rel (%p81) target = $region16
      $region15: #{tpu_custom_call.1} parent=5 // pred_region
        // Predicated region
        $region17: #{tpu_custom_call.1} parent=15 // pred_check
          %p84 = pneg %p33
        $region18: #{tpu_custom_call.1} parent=15 // pred_check_branch
          %86 = sbr.rel (%p84) target = $region20
        $region19: #{tpu_custom_call.1} parent=15 // pred_region
          %s87 = sand.u32 %s23, 1
          %s88 = scalar_lea.sflag [#allocation4], %s87
          %s89 = sand.u32 %s23, 1
          %s90 = smul.addr %s89, 64
          %s91 = scalar_lea.vmem [#allocation3], %s90
          %s93 = ssub.s32 1024, 1024
          %94 = vsyncadd %s88, %s93
          %s95 = smul.addr %s13, 8
          %s96 = smul.addr %s95, 128
          %s97 = scalar_lea.hbm %s0, %s96
          %s98 = sshll.u32 %s91, 4
          %s99 = int_to_ptr.vmem [resolvable:$true] %s98
          %104 = dma.hbm_to_vmem [thread:$0]  %s97, 1024, %s99, %s88, 128, 128, 8
        $region20: #{tpu_custom_call.1} parent=15 // pred_fallthru
          _
      $region16: #{tpu_custom_call.1} parent=5 // pred_fallthru
        _
      %p105 = scmp.le.s32.totalorder 1, %s13
      %p106 = scmp.lt.s32.totalorder %s13, 3
      %p107 = pnand %p105, %p106
      %p108 = pneg %p107
      // Predicated region
      $region21: #{tpu_custom_call.1} parent=5 // pred_check
        _
      $region22: #{tpu_custom_call.1} parent=5 // pred_check_branch
        %110 = sbr.rel (%p107) target = $region24
      $region23: #{tpu_custom_call.1} parent=5 // pred_region
        %s111 = ssub.s32 %s13, 1
        %s112 = sand.u32 %s26, 1
        %s113 = scalar_lea.sflag [#allocation4], %s112
        %s114 = sand.u32 %s26, 1
        %s115 = smul.addr %s114, 64
        %s116 = scalar_lea.vmem [#allocation3], %s115
        // Predicated region
        $region25: #{tpu_custom_call.1} parent=23 // pred_check
          %p117 = pneg %p39
        $region26: #{tpu_custom_call.1} parent=23 // pred_check_branch
          %119 = sbr.rel (%p117) target = $region28
        $region27: #{tpu_custom_call.1} parent=23 // pred_region
          %120 = dma.done %s113, 1024
        $region28: #{tpu_custom_call.1} parent=23 // pred_fallthru
          _
        %s121 = sand.u32 %s26, 1
        %s122 = scalar_lea.sflag [#allocation4], %s121
        %s123 = sand.u32 %s26, 1
        %s124 = smul.addr %s123, 64
        %s125 = scalar_lea.vmem [#allocation3], %s124
        %p126 = pneg %p39
        %p127 = pneg %p36
        %p128 = pneg %p65
        %p129 = pneg %p62
        %s130 = sand.u32 %s52, 1
        %s131 = scalar_lea.sflag [#allocation5], %s130
        %s132 = sand.u32 %s52, 1
        %s133 = smul.addr %s132, 16
        %s134 = scalar_lea.vmem [#allocation6], %s133
        %v135 = vld [vmem:[%s116] sm:$0xff]
        %v136 = vld [vmem:[%s116 + $0x8] sm:$0xff]
        %s137 = scalar_lea.vmem %s116, 16 [#allocation3]
        %v138 = vld [vmem:[%s137] sm:$0xff]
        %v139 = vld [vmem:[%s137 + $0x8] sm:$0xff]
        %v140 = vmin.f32 %v135, %v138
        %v141 = vmin.f32 %v136, %v139
        %s142 = scalar_lea.vmem %s116, 32 [#allocation3]
        %v143 = vld [vmem:[%s142] sm:$0xff]
        %v144 = vld [vmem:[%s142 + $0x8] sm:$0xff]
        %v145 = vmin.f32 %v140, %v143
        %v146 = vmin.f32 %v141, %v144
        %s147 = scalar_lea.vmem %s116, 48 [#allocation3]
        %v148 = vld [vmem:[%s147] sm:$0xff]
        %v149 = vld [vmem:[%s147 + $0x8] sm:$0xff]
        %v150 = vmin.f32 %v145, %v148
        %v151 = vmin.f32 %v146, %v149
        %152 = vst [vmem:[#allocation2] sm:$0xff] inf
        %153 = vst [vmem:[#allocation2 + $0x8] sm:$0xff] inf
        %154 = vst [vmem:[#allocation2 + $0x10] sm:$0xff] inf
        %155 = vst [vmem:[#allocation2 + $0x18] sm:$0xff] inf
        %156 = vst [vmem:[#allocation2 + $0x20] sm:$0xff] inf
        %157 = vst [vmem:[#allocation2 + $0x28] sm:$0xff] inf
        %158 = vst [vmem:[#allocation2 + $0x30] sm:$0xff] inf
        %159 = vst [vmem:[#allocation2 + $0x38] sm:$0xff] inf
        %vm160 = vcmask 130048
        %161 = vst.msk [vmem:[#allocation2 + $0x18] sm:$0xff] %vm160, %v150
        %162 = vst.msk [vmem:[#allocation2 + $0x28] sm:$0xff] %vm160, %v151
        %v163 = vld [vmem:[#allocation2] sm:$0xff]
        %v164 = vld [vmem:[#allocation2 + $0x8] sm:$0xff]
        %v165 = vld [vmem:[#allocation2 + $0x10] sm:$0xff]
        %v166 = vld [vmem:[#allocation2 + $0x18] sm:$0xff]
        %v167 = vld [vmem:[#allocation2 + $0x20] sm:$0xff]
        %v168 = vld [vmem:[#allocation2 + $0x28] sm:$0xff]
        %v169 = vld [vmem:[#allocation2 + $0x30] sm:$0xff]
        %v170 = vld [vmem:[#allocation2 + $0x38] sm:$0xff]
        %171 = vrot.lane.b32.xlu0 %v163, 1
        %v172 = vpop.permute.xlu0 %171
        %173 = vrot.lane.b32.xlu0 %v165, 1
        %v174 = vpop.permute.xlu0 %173
        %175 = vrot.lane.b32.xlu0 %v167, 1
        %v176 = vpop.permute.xlu0 %175
        %177 = vrot.lane.b32.xlu0 %v169, 1
        %v178 = vpop.permute.xlu0 %177
        %179 = vrot.lane.b32.xlu0 %v164, 1
        %v180 = vpop.permute.xlu0 %179
        %181 = vrot.lane.b32.xlu0 %v166, 1
        %v182 = vpop.permute.xlu0 %181
        %183 = vrot.lane.b32.xlu0 %v168, 1
        %v184 = vpop.permute.xlu0 %183
        %185 = vrot.lane.b32.xlu0 %v170, 1
        %v186 = vpop.permute.xlu0 %185
        %v187 = vlaneseq
        %v188 = vand.u32 %v187, 127
        %vm189 = vcmp.lt.s32.totalorder %v188, 1
        %v190 = vsel %vm189, %v172, %v180
        %v191 = vsel %vm189, %v174, %v182
        %v192 = vsel %vm189, %v176, %v184
        %v193 = vsel %vm189, %v178, %v186
        %v194 = vmin.f32 %v164, %v190
        %v195 = vmin.f32 %v166, %v191
        %v196 = vmin.f32 %v168, %v192
        %v197 = vmin.f32 %v170, %v193
        %198 = vrot.lane.b32.xlu0 %v163, 127
        %v199 = vpop.permute.xlu0 %198
        %200 = vrot.lane.b32.xlu0 %v165, 127
        %v201 = vpop.permute.xlu0 %200
        %202 = vrot.lane.b32.xlu0 %v167, 127
        %v203 = vpop.permute.xlu0 %202
        %204 = vrot.lane.b32.xlu0 %v169, 127
        %v205 = vpop.permute.xlu0 %204
        %206 = vrot.lane.b32.xlu0 %v164, 127
        %v207 = vpop.permute.xlu0 %206
        %208 = vrot.lane.b32.xlu0 %v166, 127
        %v209 = vpop.permute.xlu0 %208
        %210 = vrot.lane.b32.xlu0 %v168, 127
        %v211 = vpop.permute.xlu0 %210
        %212 = vrot.lane.b32.xlu0 %v170, 127
        %v213 = vpop.permute.xlu0 %212
        %vm214 = vcmp.lt.s32.totalorder %v188, 127
        %v215 = vsel %vm214, %v207, %v199
        %v216 = vsel %vm214, %v209, %v201
        %v217 = vsel %vm214, %v211, %v203
        %v218 = vsel %vm214, %v213, %v205
        %v219 = vmin.f32 %v194, %v215
        %v220 = vmin.f32 %v195, %v216
        %v221 = vmin.f32 %v196, %v217
        %v222 = vmin.f32 %v197, %v218
        %v223 = vrot.slane %v219, 7
        %v224 = vrot.slane %v220, 7
        %v225 = vrot.slane %v221, 7
        %v226 = vlaneseq
        %v227 = vshrl.u32 %v226, 7
        %vm228 = vcmp.lt.s32.totalorder %v227, 1
        %v229 = vsel %vm228, %v224, %v225
        %v230 = vsel %vm228, %v223, %v224
        %v231 = vmin.f32 %v220, %v230
        %v232 = vmin.f32 %v221, %v229
        %v233 = vrot.slane %v220, 1
        %v234 = vrot.slane %v221, 1
        %v235 = vrot.slane %v222, 1
        %vm236 = vcmp.lt.s32.totalorder %v227, 7
        %v237 = vsel %vm236, %v234, %v235
        %v238 = vsel %vm236, %v233, %v234
        %v239 = vmin.f32 %v231, %v238
        %v240 = vmin.f32 %v232, %v237
        %241 = vst.msk [vmem:[%s134] sm:$0xff] %vm160, %v239
        %242 = vst.msk [vmem:[%s134 + $0x8] sm:$0xff] %vm160, %v240
        %s243 = sand.u32 %s52, 1
        %s244 = scalar_lea.sflag [#allocation5], %s243
        %s245 = sand.u32 %s52, 1
        %s246 = smul.addr %s245, 16
        %s247 = scalar_lea.vmem [#allocation6], %s246
        // Predicated region
        $region29: #{tpu_custom_call.1} parent=23 // pred_check
          %p248 = pneg %p62
        $region30: #{tpu_custom_call.1} parent=23 // pred_check_branch
          %250 = sbr.rel (%p248) target = $region32
        $region31: #{tpu_custom_call.1} parent=23 // pred_region
          %s252 = ssub.s32 256, 256
          %253 = vsyncadd %s244, %s252
          %s254 = smul.addr %s18, 2
          %s255 = smul.addr %s254, 128
          %s256 = scalar_lea.hbm %s1, %s255
          %s257 = sshll.u32 %s247, 4
          %s258 = int_to_ptr.vmem [resolvable:$true] %s257
          %263 = dma.vmem_to_hbm [thread:$0]  %s258, 256, %s256, %s244, 128, 128, 8
        $region32: #{tpu_custom_call.1} parent=23 // pred_fallthru
          _
      $region24: #{tpu_custom_call.1} parent=5 // pred_fallthru
        _
      %p264 = scmp.le.s32.totalorder 2, %s13
      // Predicated region
      $region33: #{tpu_custom_call.1} parent=5 // pred_check
        %p265 = pneg %p264
      $region34: #{tpu_custom_call.1} parent=5 // pred_check_branch
        %267 = sbr.rel (%p265) target = $region36
      $region35: #{tpu_custom_call.1} parent=5 // pred_region
        %s268 = ssub.s32 %s13, 2
        // Predicated region
        $region37: #{tpu_custom_call.1} parent=35 // pred_check
          %p269 = pneg %p68
        $region38: #{tpu_custom_call.1} parent=35 // pred_check_branch
          %271 = sbr.rel (%p269) target = $region40
        $region39: #{tpu_custom_call.1} parent=35 // pred_region
          %s272 = sand.u32 %s53, 1
          %s273 = scalar_lea.sflag [#allocation5], %s272
          %s274 = sand.u32 %s53, 1
          %s275 = smul.addr %s274, 16
          %s276 = scalar_lea.vmem [#allocation6], %s275
          %277 = dma.done %s273, 256
        $region40: #{tpu_custom_call.1} parent=35 // pred_fallthru
          _
      $region36: #{tpu_custom_call.1} parent=5 // pred_fallthru
        _
    $region6: #{tpu_custom_call.1} parent=1 // loop_footer
      %s17 = sadd.s32 1, %s13
    $region7: #{tpu_custom_call.1} parent=1 // loop_footer_branch
      %12 = sbr.rel target = $region3
    $region8: #{tpu_custom_call.1} parent=1 // loop_exit
      _
    %278 = vsyncpa [#allocation4], 1
    %s279 = scalar_lea.sflag [#allocation4], 1
    %280 = vsyncpa %s279, 1
    %281 = vsyncpa [#allocation5], 1
    %s282 = scalar_lea.sflag [#allocation5], 1
    %283 = vsyncpa %s282, 1

</llo_original>
